<compile_context>
chip_gen: v7x
topology: tpu7x:2x2x1
jax: 0.10.0
libtpu: 0.0.40
codegen_flags: <defaults>
</compile_context>

<pallas_src>
import jax
import jax.numpy as jnp
from jax.experimental import pallas as pl
from jax.experimental.pallas import tpu as pltpu

LANES = 128          # TPU vreg lane width -> lane-dense output slab
NEG_BIG = -1e30      # bias for padded output lanes -> exp() underflows to exactly 0


def _round_up(n, m):
    return ((n + m - 1) // m) * m


def policy_net_kernel(x_ref, w1_ref, b1_ref, w2_ref, b2_ref, out_ref):
    # fc1 + ReLU  (K = input_dim is tiny; MXU is under-utilized here but correct.
    # TODO(synk): on v5e a VPU broadcast-multiply-sum path for this K=4 contraction
    # would avoid MXU fill/drain latency.)
    x = x_ref[...]
    h = jnp.dot(x, w1_ref[...], preferred_element_type=jnp.float32) + b1_ref[...]
    h = jnp.maximum(h, 0.0)

    # fc2 over the lane-padded output (padded lanes carry a -1e30 bias).
    logits = jnp.dot(h, w2_ref[...], preferred_element_type=jnp.float32) + b2_ref[...]

    # Numerically stable softmax over the last dim. Padded lanes give exp(.) == 0,
    # so the normalization over 128 lanes equals softmax over the real O lanes.
    # Exact divide (not approx reciprocal) so we match jax.nn.softmax to f32 rounding.
    m = jnp.max(logits, axis=-1, keepdims=True)
    e = jnp.exp(logits - m)
    denom = jnp.sum(e, axis=-1, keepdims=True)
    out_ref[...] = (e / denom).astype(out_ref.dtype)


def policy_net_forward(x, w1, b1, w2, b2):
    B, in_dim = x.shape
    H = w1.shape[1]
    O = w2.shape[1]

    # --- batch tiling ----------------------------------------------------------
    # TILE_B: multiple of 8 (f32 sublane); cap at 512 rows for large RL batches.
    TILE_B = 512 if B >= 512 else _round_up(max(B, 1), 8)
    B_pad = _round_up(B, TILE_B)
    num_tiles = B_pad // TILE_B

    # --- lane-dense output padding --------------------------------------------
    O_pad = _round_up(O, LANES)
    x_p = jnp.pad(x, ((0, B_pad - B), (0, 0)))
    w2_p = jnp.pad(w2, ((0, 0), (0, O_pad - O)))                       # zero weights
    b2_p = jnp.pad(b2, ((0, 0), (0, O_pad - O)), constant_values=NEG_BIG)

    out_padded = pl.pallas_call(
        policy_net_kernel,
        out_shape=jax.ShapeDtypeStruct((B_pad, O_pad), jnp.float32),
        grid=(num_tiles,),
        in_specs=[
            pl.BlockSpec((TILE_B, in_dim), lambda i: (i, 0)),   # streamed per tile
            pl.BlockSpec((in_dim, H), lambda i: (0, 0)),        # weights resident
            pl.BlockSpec((1, H), lambda i: (0, 0)),
            pl.BlockSpec((H, O_pad), lambda i: (0, 0)),
            pl.BlockSpec((1, O_pad), lambda i: (0, 0)),
        ],
        out_specs=pl.BlockSpec((TILE_B, O_pad), lambda i: (i, 0)),
        compiler_params=pltpu.CompilerParams(
            dimension_semantics=("parallel",),       # v7x: shard batch tiles over 2 TCs
            vmem_limit_bytes=32 * 1024 * 1024,       # budgeted for v7x (64 MiB phys)
        ),
    )(x_p, w1, b1, w2_p, b2_p)

    # Slice back to the real batch / output size.
    return out_padded[:B, :O]


def init_params(key, input_dim, hidden_dim, output_dim):
    # Deterministic synthetic init (PyTorch-like uniform(-1/sqrt(fan_in), +1/sqrt(fan_in))).
    k1, k2, k3, k4 = jax.random.split(key, 4)
    bound1 = 1.0 / jnp.sqrt(input_dim)
    bound2 = 1.0 / jnp.sqrt(hidden_dim)
    w1 = jax.random.uniform(k1, (input_dim, hidden_dim), jnp.float32, -bound1, bound1)
    b1 = jax.random.uniform(k2, (1, hidden_dim), jnp.float32, -bound1, bound1)
    w2 = jax.random.uniform(k3, (hidden_dim, output_dim), jnp.float32, -bound2, bound2)
    b2 = jax.random.uniform(k4, (1, output_dim), jnp.float32, -bound2, bound2)
    return w1, b1, w2, b2


def reference_forward(x, w1, b1, w2, b2):
    h = jnp.maximum(x @ w1 + b1, 0.0)
    logits = h @ w2 + b2
    return jax.nn.softmax(logits, axis=-1)


if __name__ == "__main__":
    batch, input_dim, hidden_dim, output_dim = 2, 4, 32, 8

    key = jax.random.PRNGKey(0)
    kx, kp = jax.random.split(key)
    x = jax.random.normal(kx, (batch, input_dim), jnp.float32)
    w1, b1, w2, b2 = init_params(kp, input_dim, hidden_dim, output_dim)

    out = policy_net_forward(x, w1, b1, w2, b2)
    out = jax.block_until_ready(out)

    ref = reference_forward(x, w1, b1, w2, b2)
    assert out.shape == (batch, output_dim)
    assert jnp.allclose(out, ref, atol=1e-5, rtol=1e-5)
    assert jnp.allclose(jnp.sum(out, axis=-1), jnp.ones((batch,)), atol=1e-5)

    print("KERNEL_OK")
</pallas_src>

<mosaic_0001>
module attributes {stable_mosaic.version = 11 : i64} {
  func.func @policy_net_kernel(%arg0: i32, %arg1: memref<8x4xf32, #tpu.memory_space<vmem>>, %arg2: memref<4x32xf32, #tpu.memory_space<vmem>>, %arg3: memref<1x32xf32, #tpu.memory_space<vmem>>, %arg4: memref<32x128xf32, #tpu.memory_space<vmem>>, %arg5: memref<1x128xf32, #tpu.memory_space<vmem>>, %arg6: memref<8x128xf32, #tpu.memory_space<vmem>>) attributes {dimension_semantics = [#tpu.dimension_semantics<parallel>], iteration_bounds = array<i64: 1>, scalar_prefetch = 0 : i64, scratch_operands = 0 : i64, tpu.core_type = #tpu.core_type<tc>, window_params = [{transform_indices = @transform_0, window_bounds = array<i64: 8, 4>}, {pipeline_mode = #tpu.pipeline_mode<synchronous>, transform_indices = @transform_1, window_bounds = array<i64: 4, 32>}, {pipeline_mode = #tpu.pipeline_mode<synchronous>, transform_indices = @transform_2, window_bounds = array<i64: 1, 32>}, {pipeline_mode = #tpu.pipeline_mode<synchronous>, transform_indices = @transform_3, window_bounds = array<i64: 32, 128>}, {pipeline_mode = #tpu.pipeline_mode<synchronous>, transform_indices = @transform_4, window_bounds = array<i64: 1, 128>}, {transform_indices = @transform_5, window_bounds = array<i64: 8, 128>}]} {
    %c0 = arith.constant 0 : index
    %c0_0 = arith.constant 0 : index
    %0 = vector.load %arg1[%c0, %c0_0] : memref<8x4xf32, #tpu.memory_space<vmem>>, vector<8x4xf32>
    %c0_1 = arith.constant 0 : index
    %c0_2 = arith.constant 0 : index
    %1 = vector.load %arg2[%c0_1, %c0_2] : memref<4x32xf32, #tpu.memory_space<vmem>>, vector<4x32xf32>
    %cst = arith.constant dense<0.000000e+00> : vector<8x32xf32>
    %2 = tpu.matmul %0, %1, %cst {dimension_numbers = #tpu.dot_dimension_numbers<[1], [0], [0], [1], [0, 0, 1, 1], [], []>} : vector<8x4xf32>, vector<4x32xf32>, vector<8x32xf32> -> vector<8x32xf32>
    %c0_3 = arith.constant 0 : index
    %c0_4 = arith.constant 0 : index
    %3 = vector.load %arg3[%c0_3, %c0_4] : memref<1x32xf32, #tpu.memory_space<vmem>>, vector<1x32xf32>
    %4 = vector.broadcast %3 : vector<1x32xf32> to vector<8x32xf32>
    %5 = arith.addf %2, %4 : vector<8x32xf32>
    %cst_5 = arith.constant 0.000000e+00 : f32
    %6 = vector.broadcast %cst_5 : f32 to vector<8x32xf32>
    %7 = arith.maximumf %5, %6 : vector<8x32xf32>
    %c0_6 = arith.constant 0 : index
    %c0_7 = arith.constant 0 : index
    %8 = vector.load %arg4[%c0_6, %c0_7] : memref<32x128xf32, #tpu.memory_space<vmem>>, vector<32x128xf32>
    %cst_8 = arith.constant dense<0.000000e+00> : vector<8x128xf32>
    %9 = tpu.matmul %7, %8, %cst_8 {dimension_numbers = #tpu.dot_dimension_numbers<[1], [0], [0], [1], [0, 0, 1, 1], [], []>} : vector<8x32xf32>, vector<32x128xf32>, vector<8x128xf32> -> vector<8x128xf32>
    %c0_9 = arith.constant 0 : index
    %c0_10 = arith.constant 0 : index
    %10 = vector.load %arg5[%c0_9, %c0_10] : memref<1x128xf32, #tpu.memory_space<vmem>>, vector<1x128xf32>
    %11 = vector.broadcast %10 : vector<1x128xf32> to vector<8x128xf32>
    %12 = arith.addf %9, %11 : vector<8x128xf32>
    %cst_11 = arith.constant dense<0xFF800000> : vector<8xf32>
    %13 = vector.multi_reduction <maximumf>, %12, %cst_11 [1] : vector<8x128xf32> to vector<8xf32>
    %14 = vector.shape_cast %13 : vector<8xf32> to vector<8x1xf32>
    %15 = vector.broadcast %14 : vector<8x1xf32> to vector<8x128xf32>
    %16 = arith.subf %12, %15 : vector<8x128xf32>
    %17 = math.exp %16 : vector<8x128xf32>
    %cst_12 = arith.constant dense<0.000000e+00> : vector<8xf32>
    %18 = vector.multi_reduction <add>, %17, %cst_12 [1] : vector<8x128xf32> to vector<8xf32>
    %19 = vector.shape_cast %18 : vector<8xf32> to vector<8x1xf32>
    %20 = vector.broadcast %19 : vector<8x1xf32> to vector<8x128xf32>
    %21 = arith.divf %17, %20 : vector<8x128xf32>
    %c0_13 = arith.constant 0 : index
    %c0_14 = arith.constant 0 : index
    %22 = vector.load %arg6[%c0_13, %c0_14] : memref<8x128xf32, #tpu.memory_space<vmem>>, vector<8x128xf32>
    tpu.vector_store %arg6[%c0_13, %c0_14], %21 {strides = array<i32>} : memref<8x128xf32, #tpu.memory_space<vmem>>, vector<8x128xf32>,
    return
  }
  func.func @transform_0(%arg0: i32) -> (i32, i32) {
    %c0_i32 = arith.constant 0 : i32
    %c0_i32_0 = arith.constant 0 : i32
    return %arg0, %c0_i32 : i32, i32
  }
  func.func @transform_1(%arg0: i32) -> (i32, i32) {
    %c0_i32 = arith.constant 0 : i32
    %c0_i32_0 = arith.constant 0 : i32
    %c0_i32_1 = arith.constant 0 : i32
    return %c0_i32, %c0_i32_0 : i32, i32
  }
  func.func @transform_2(%arg0: i32) -> (i32, i32) {
    %c0_i32 = arith.constant 0 : i32
    %c0_i32_0 = arith.constant 0 : i32
    %c0_i32_1 = arith.constant 0 : i32
    return %c0_i32, %c0_i32_0 : i32, i32
  }
  func.func @transform_3(%arg0: i32) -> (i32, i32) {
    %c0_i32 = arith.constant 0 : i32
    %c0_i32_0 = arith.constant 0 : i32
    %c0_i32_1 = arith.constant 0 : i32
    return %c0_i32, %c0_i32_0 : i32, i32
  }
  func.func @transform_4(%arg0: i32) -> (i32, i32) {
    %c0_i32 = arith.constant 0 : i32
    %c0_i32_0 = arith.constant 0 : i32
    %c0_i32_1 = arith.constant 0 : i32
    return %c0_i32, %c0_i32_0 : i32, i32
  }
  func.func @transform_5(%arg0: i32) -> (i32, i32) {
    %c0_i32 = arith.constant 0 : i32
    %c0_i32_0 = arith.constant 0 : i32
    return %arg0, %c0_i32 : i32, i32
  }
}

</mosaic_0001>

<llo_original>
// kernel: tpu_custom_call.1
$region0: #{tpu_custom_call.1}
  #allocation0 [shape = 'u32[]', space=smem, size = 0x4, offset = 0x4, fixed_abs, tag = 'smem constant byte address 0x4 - core index']
  #allocation1 [shape = 'u32[144,128]{1,0:T(1,128)}', space=vmem, size = 0x12000, scoped, tag = 'internal scratch']
  %s0 = inlined_call_operand.vmem [shape: f32[8,4], index: 0, kind: input, shape index: {}]
  %s1 = inlined_call_operand.vmem [shape: f32[4,32], index: 1, kind: input, shape index: {}]
  %s2 = inlined_call_operand.vmem [shape: f32[1,32], index: 2, kind: input, shape index: {}]
  %s3 = inlined_call_operand.hbm [shape: f32[32,128], index: 3, kind: input, shape index: {}]
  %s4 = inlined_call_operand.vmem [shape: f32[1,128], index: 4, kind: input, shape index: {}]
  %s5 = inlined_call_operand.hbm [shape: f32[8,128], index: 5, kind: output, shape index: {}]
  %s6 = sld [smem:[#allocation0]]
  $region34: #{tpu_custom_call.1} parent=0
    _
  %s8 = ssub.s32 1, %s6
  %s9 = scalar_select 0, %s8, %s6
  $region1: #{tpu_custom_call.1} parent=0
    #allocation2 [shape = 'u8[16384]{0}', space=vmem, size = 0x4000, scoped, tag = 'input window, operand 3, single buffered']
    #allocation3 [shape = 's32[1]{0}', space=sflag, size = 0x4, scoped, tag = 'scoped memory for tpu_custom_call.1']
    #allocation4 [shape = 's32[1]{0}', space=sflag, size = 0x4, scoped, tag = 'scoped memory for tpu_custom_call.1']
    #allocation5 [shape = 'u8[4096]{0}', space=vmem, size = 0x1000, scoped, tag = 'output window, operand 0, single buffered']
    %10 = vsyncpa [#allocation3], 0
    %11 = vsyncpa [#allocation4], 0
    // Predicated region
    $region2: #{tpu_custom_call.1} parent=1 // pred_check
      _
    $region3: #{tpu_custom_call.1} parent=1 // pred_check_branch
      %13 = sbr.rel (0) target = $region5
    $region4: #{tpu_custom_call.1} parent=1 // pred_region
      _
    $region5: #{tpu_custom_call.1} parent=1 // pred_fallthru
      _
    // Predicated region
    $region6: #{tpu_custom_call.1} parent=1 // pred_check
      _
    $region7: #{tpu_custom_call.1} parent=1 // pred_check_branch
      %15 = sbr.rel (0) target = $region9
    $region8: #{tpu_custom_call.1} parent=1 // pred_region
      _
    $region9: #{tpu_custom_call.1} parent=1 // pred_fallthru
      _
    // Predicated region
    $region10: #{tpu_custom_call.1} parent=1 // pred_check
      _
    $region11: #{tpu_custom_call.1} parent=1 // pred_check_branch
      %17 = sbr.rel (0) target = $region13
    $region12: #{tpu_custom_call.1} parent=1 // pred_region
      _
    $region13: #{tpu_custom_call.1} parent=1 // pred_fallthru
      _
    // Predicated region
    $region14: #{tpu_custom_call.1} parent=1 // pred_check
      _
    $region15: #{tpu_custom_call.1} parent=1 // pred_check_branch
      %19 = sbr.rel (0) target = $region17
    $region16: #{tpu_custom_call.1} parent=1 // pred_region
      %s21 = ssub.s32 512, 512
      %22 = vsyncadd [#allocation3], %s21
      %s23 = sshll.u32 [#allocation2], 4
      %s24 = int_to_ptr.vmem [resolvable:$true] %s23
      %29 = dma.hbm_to_vmem [thread:$0]  %s3, 512, %s24, [#allocation3], 128, 128, 8
    $region17: #{tpu_custom_call.1} parent=1 // pred_fallthru
      _
    // Predicated region
    $region18: #{tpu_custom_call.1} parent=1 // pred_check
      _
    $region19: #{tpu_custom_call.1} parent=1 // pred_check_branch
      %31 = sbr.rel (0) target = $region21
    $region20: #{tpu_custom_call.1} parent=1 // pred_region
      _
    $region21: #{tpu_custom_call.1} parent=1 // pred_fallthru
      _
    // Predicated region
    $region22: #{tpu_custom_call.1} parent=1 // pred_check
      _
    $region23: #{tpu_custom_call.1} parent=1 // pred_check_branch
      %33 = sbr.rel (0) target = $region25
    $region24: #{tpu_custom_call.1} parent=1 // pred_region
      %34 = dma.done [#allocation3], 512
    $region25: #{tpu_custom_call.1} parent=1 // pred_fallthru
      _
    %v35 = vld [vmem:[%s0] sm:$0xff]
    %v36 = vld [vmem:[%s1] sm:$0xf]
    %v37 = vld [vmem:[%s2] sm:$0x1]
    %v39 = vlaneseq
    %v40 = vshrl.u32 %v39, 7
    %v41 = vsub.s32 0, %v40
    %v42 = vrot.slane %v37, %v41
    %vm44 = vcmask 31744
    %v46 = vsel %vm44, %v35, 0
    %vm48 = vcmask 1043456
    %v50 = vsel %vm48, %v36, 0
    %52 = vmatprep.subr.mxu0 0.0
    %53 = vmatpush1.msra.mxu0 %v50
    %54 = vmatprep.subr.mxu0 0.0
    %55 = vmatpush1.msra.mxu0 0.0
    %56 = vmatprep.subr.mxu0 0.0
    %57 = vmatpush1.msra.mxu0 0.0
    %58 = vmatprep.subr.mxu0 0.0
    %59 = vmatpush1.msra.mxu0 0.0
    %60 = vmatprep.subr.mxu0 0.0
    %61 = vmatpush1.msra.mxu0 0.0
    %62 = vmatprep.subr.mxu0 0.0
    %63 = vmatpush1.msra.mxu0 0.0
    %64 = vmatprep.subr.mxu0 0.0
    %65 = vmatpush1.msra.mxu0 0.0
    %66 = vmatprep.subr.mxu0 0.0
    %67 = vmatpush1.msra.mxu0 0.0
    %68 = vmatprep.subr.mxu0 0.0
    %69 = vmatpush1.msra.mxu0 0.0
    %70 = vmatprep.subr.mxu0 0.0
    %71 = vmatpush1.msra.mxu0 0.0
    %72 = vmatprep.subr.mxu0 0.0
    %73 = vmatpush1.msra.mxu0 0.0
    %74 = vmatprep.subr.mxu0 0.0
    %75 = vmatpush1.msra.mxu0 0.0
    %76 = vmatprep.subr.mxu0 0.0
    %77 = vmatpush1.msra.mxu0 0.0
    %78 = vmatprep.subr.mxu0 0.0
    %79 = vmatpush1.msra.mxu0 0.0
    %80 = vmatprep.subr.mxu0 0.0
    %81 = vmatpush1.msra.mxu0 0.0
    %82 = vmatprep.subr.mxu0 0.0
    %83 = vmatpush1.msra.mxu0 0.0
    %84 = vmatprep.subr.mxu0 0.0
    %85 = vmatpush1.msra.mxu0 0.0
    %86 = vmatprep.subr.mxu0 0.0
    %87 = vmatpush1.msra.mxu0 0.0
    %88 = vmatprep.subr.mxu0 0.0
    %89 = vmatpush1.msra.mxu0 0.0
    %90 = vmatprep.subr.mxu0 0.0
    %91 = vmatpush1.msra.mxu0 0.0
    %92 = vmatprep.subr.mxu0 0.0
    %93 = vmatpush1.msra.mxu0 0.0
    %94 = vmatprep.subr.mxu0 0.0
    %95 = vmatpush1.msra.mxu0 0.0
    %96 = vmatprep.subr.mxu0 0.0
    %97 = vmatpush1.msra.mxu0 0.0
    %98 = vmatprep.subr.mxu0 0.0
    %99 = vmatpush1.msra.mxu0 0.0
    %100 = vmatprep.subr.mxu0 0.0
    %101 = vmatpush1.msra.mxu0 0.0
    %102 = vmatprep.subr.mxu0 0.0
    %103 = vmatpush1.msra.mxu0 0.0
    %104 = vmatprep.subr.mxu0 0.0
    %105 = vmatpush1.msra.mxu0 0.0
    %106 = vmatprep.subr.mxu0 0.0
    %107 = vmatpush1.msra.mxu0 0.0
    %108 = vmatprep.subr.mxu0 0.0
    %109 = vmatpush1.msra.mxu0 0.0
    %110 = vmatprep.subr.mxu0 0.0
    %111 = vmatpush1.msra.mxu0 0.0
    %112 = vmatprep.subr.mxu0 0.0
    %113 = vmatpush1.msra.mxu0 0.0
    %114 = vmatprep.subr.mxu0 0.0
    %115 = vmatpush1.msra.mxu0 0.0
    %116 = vmatprep.mubr.f32.mxu0 0.0
    %117 = vmatmul.mubr.f32.gmra.mrb[0].mxu0 %v46
    %v118 = vpop.f32.mrb[0].mxu0
    %v119 = vadd.f32 %v42, %v118
    %v120 = vpop.f32.mrb[0].mxu0
    %121 = vdwg.mxu0
    %v122 = vmax.f32 %v119, 0.0
    %v123 = vld [vmem:[#allocation2] sm:$0xff]
    %v124 = vld [vmem:[#allocation2 + $0x8] sm:$0xff]
    %v125 = vld [vmem:[#allocation2 + $0x10] sm:$0xff]
    %v126 = vld [vmem:[#allocation2 + $0x18] sm:$0xff]
    %v127 = vld [vmem:[%s4] sm:$0x1]
    %v129 = vlaneseq
    %v130 = vshrl.u32 %v129, 7
    %v131 = vsub.s32 0, %v130
    %v132 = vrot.slane %v127, %v131
    %vm134 = vcmask 261120
    %v136 = vsel %vm134, %v122, 0
    %138 = vmatprep.subr.mxu0 0.0
    %139 = vmatpush1.msra.mxu0 %v123
    %140 = vmatprep.subr.mxu0 0.0
    %141 = vmatpush1.msra.mxu0 %v124
    %142 = vmatprep.subr.mxu0 0.0
    %143 = vmatpush1.msra.mxu0 %v125
    %144 = vmatprep.subr.mxu0 0.0
    %145 = vmatpush1.msra.mxu0 %v126
    %146 = vmatprep.subr.mxu0 0.0
    %147 = vmatpush1.msra.mxu0 0.0
    %148 = vmatprep.subr.mxu0 0.0
    %149 = vmatpush1.msra.mxu0 0.0
    %150 = vmatprep.subr.mxu0 0.0
    %151 = vmatpush1.msra.mxu0 0.0
    %152 = vmatprep.subr.mxu0 0.0
    %153 = vmatpush1.msra.mxu0 0.0
    %154 = vmatprep.subr.mxu0 0.0
    %155 = vmatpush1.msra.mxu0 0.0
    %156 = vmatprep.subr.mxu0 0.0
    %157 = vmatpush1.msra.mxu0 0.0
    %158 = vmatprep.subr.mxu0 0.0
    %159 = vmatpush1.msra.mxu0 0.0
    %160 = vmatprep.subr.mxu0 0.0
    %161 = vmatpush1.msra.mxu0 0.0
    %162 = vmatprep.subr.mxu0 0.0
    %163 = vmatpush1.msra.mxu0 0.0
    %164 = vmatprep.subr.mxu0 0.0
    %165 = vmatpush1.msra.mxu0 0.0
    %166 = vmatprep.subr.mxu0 0.0
    %167 = vmatpush1.msra.mxu0 0.0
    %168 = vmatprep.subr.mxu0 0.0
    %169 = vmatpush1.msra.mxu0 0.0
    %170 = vmatprep.subr.mxu0 0.0
    %171 = vmatpush1.msra.mxu0 0.0
    %172 = vmatprep.subr.mxu0 0.0
    %173 = vmatpush1.msra.mxu0 0.0
    %174 = vmatprep.subr.mxu0 0.0
    %175 = vmatpush1.msra.mxu0 0.0
    %176 = vmatprep.subr.mxu0 0.0
    %177 = vmatpush1.msra.mxu0 0.0
    %178 = vmatprep.subr.mxu0 0.0
    %179 = vmatpush1.msra.mxu0 0.0
    %180 = vmatprep.subr.mxu0 0.0
    %181 = vmatpush1.msra.mxu0 0.0
    %182 = vmatprep.subr.mxu0 0.0
    %183 = vmatpush1.msra.mxu0 0.0
    %184 = vmatprep.subr.mxu0 0.0
    %185 = vmatpush1.msra.mxu0 0.0
    %186 = vmatprep.subr.mxu0 0.0
    %187 = vmatpush1.msra.mxu0 0.0
    %188 = vmatprep.subr.mxu0 0.0
    %189 = vmatpush1.msra.mxu0 0.0
    %190 = vmatprep.subr.mxu0 0.0
    %191 = vmatpush1.msra.mxu0 0.0
    %192 = vmatprep.subr.mxu0 0.0
    %193 = vmatpush1.msra.mxu0 0.0
    %194 = vmatprep.subr.mxu0 0.0
    %195 = vmatpush1.msra.mxu0 0.0
    %196 = vmatprep.subr.mxu0 0.0
    %197 = vmatpush1.msra.mxu0 0.0
    %198 = vmatprep.subr.mxu0 0.0
    %199 = vmatpush1.msra.mxu0 0.0
    %200 = vmatprep.subr.mxu0 0.0
    %201 = vmatpush1.msra.mxu0 0.0
    %202 = vmatprep.mubr.f32.mxu0 0.0
    %203 = vmatmul.mubr.f32.gmra.mrb[0].mxu0 %v136
    %v204 = vpop.f32.mrb[0].mxu0
    %v205 = vadd.f32 %v132, %v204
    %v206 = vpop.f32.mrb[0].mxu0
    %207 = vdwg.mxu0
    %208 = vmax.xlane.f32.xlu0 %v205
    %v209 = vpop.xlane.xlu0 %208
    %v210 = vsub.f32 %v205, %v209
    %v211 = vmul.f32 %v210, 1.442695
    %v212 = vpow.pop %v211
    %213 = vadd.xlane.f32.xlu0 %v212
    %v214 = vpop.xlane.xlu0 %213
    %v215 = vrcp.pop %v214
    %v216 = vmul.f32 %v212, %v215
    %217 = vst [vmem:[#allocation5] sm:$0xff] %v216
    // Predicated region
    $region26: #{tpu_custom_call.1} parent=1 // pred_check
      _
    $region27: #{tpu_custom_call.1} parent=1 // pred_check_branch
      %219 = sbr.rel (0) target = $region29
    $region28: #{tpu_custom_call.1} parent=1 // pred_region
      %s221 = ssub.s32 128, 128
      %222 = vsyncadd [#allocation4], %s221
      %s224 = sshll.u32 [#allocation5], 4
      %s225 = int_to_ptr.vmem [resolvable:$true] %s224
      %227 = dma.vmem_to_hbm [thread:$0]  %s225, 128, %s5, [#allocation4]
    $region29: #{tpu_custom_call.1} parent=1 // pred_fallthru
      _
    // Predicated region
    $region30: #{tpu_custom_call.1} parent=1 // pred_check
      _
    $region31: #{tpu_custom_call.1} parent=1 // pred_check_branch
      %229 = sbr.rel (0) target = $region33
    $region32: #{tpu_custom_call.1} parent=1 // pred_region
      %230 = dma.done [#allocation4], 128
    $region33: #{tpu_custom_call.1} parent=1 // pred_fallthru
      _
    %231 = vsyncpa [#allocation3], 1
    %232 = vsyncpa [#allocation4], 1

</llo_original>
